<compile_context>
chip_gen: v7x
topology: tpu7x:2x2x1
jax: 0.10.0
libtpu: 0.0.40
codegen_flags: <defaults>
</compile_context>

<pallas_src>
import functools

import jax
import jax.numpy as jnp
from jax.experimental import pallas as pl
from jax.experimental.pallas import tpu as pltpu

_LANE = 128
_SUBLANE = 8


def _round_up(n, m):
    return ((n + m - 1) // m) * m


def _make_discriminator_kernel(num_layers, non_linear, final_act, out_dim):
    """final_act in {"none", "softmax", "sigmoid"}; only the first `out_dim` lanes are stored."""

    def kernel(*refs):
        # refs = x, (w_0, b_0), ..., (w_{L-1}, b_{L-1}), out
        x_ref = refs[0]
        out_ref = refs[-1]
        h = x_ref[...]                      # bf16, fed straight into the first MXU matmul
        idx = 1
        for layer in range(num_layers):
            w_ref, b_ref = refs[idx], refs[idx + 1]
            idx += 2
            lhs = h if h.dtype == w_ref.dtype else h.astype(w_ref.dtype)
            # bf16 x bf16 -> f32 accumulate on the MXU; bias add stays in f32 (VPU).
            h = jnp.dot(lhs, w_ref[...], preferred_element_type=jnp.float32)
            h = h + b_ref[...]
            # TODO(synk): training-mode F.dropout (stochastic) not implemented; eval mode assumed.
            if layer < num_layers - 1 and non_linear:
                h = jnp.maximum(h, 0.0)

        if final_act == "softmax":
            # Mask the zero-padded lanes so they get zero probability; softmax over real lanes.
            lane = jax.lax.broadcasted_iota(jnp.int32, h.shape, 1)
            logits = jnp.where(lane < out_dim, h, -jnp.inf)
            m = jnp.max(logits, axis=-1, keepdims=True)
            e = jnp.exp(logits - m)
            denom = jnp.sum(e, axis=-1, keepdims=True)
            h = e * pl.reciprocal(denom, approx=True)       # EUP divide (free slot)
        elif final_act == "sigmoid":
            h = pl.reciprocal(1.0 + jnp.exp(-h), approx=True)
        # final_act == "none" (wasserstein): raw logits.

        # Slim store: only the real output lanes hit HBM (masked vst per tile, far cheaper
        # than writing the 128-lane padded slab).
        out_ref[...] = h[:, :out_dim].astype(out_ref.dtype)

    return kernel


def pack_discriminator_params(torch_weights, torch_biases, *,
                              compute_dtype=jnp.bfloat16, lane=_LANE):
    """One-time packing of PyTorch-layout Linear params (call once at init, NOT per forward).

    torch_weights[i]: (out_i, in_i) with in_0 = input_dim and in_i = out_{i-1}.
    Returns (packed_ws, packed_bs):
      packed_ws[i]: (in_pad_i, out_pad_i) = W_i.T zero-padded, cast to `compute_dtype`
      packed_bs[i]: (1, out_pad_i) f32 zero-padded bias
    Output lanes are padded to a multiple of `lane` (128) so every intermediate is a full
    unmasked vreg; zero padding keeps the math exact (padded lanes stay 0).
    """
    packed_ws, packed_bs = [], []
    prev_out_pad = None
    for i, (w, b) in enumerate(zip(torch_weights, torch_biases)):
        out_dim, in_dim = w.shape
        in_pad = in_dim if i == 0 else prev_out_pad
        out_pad = _round_up(out_dim, lane)
        wp = jnp.zeros((in_pad, out_pad), jnp.float32).at[:in_dim, :out_dim].set(w.T)
        bp = jnp.zeros((1, out_pad), jnp.float32).at[0, :out_dim].set(b)
        packed_ws.append(wp.astype(compute_dtype))
        packed_bs.append(bp)  # bias add stays in f32
        prev_out_pad = out_pad
    return packed_ws, packed_bs


def discriminator_forward(x, packed_ws, packed_bs, *, out_dim, non_linear=True,
                          is_wasserstein=False, batch_block=1024):
    """x: [B, input_dim], packed params from pack_discriminator_params. Returns [B, out_dim]."""
    B, d_in = x.shape
    out_dtype = x.dtype if x.dtype == jnp.float32 else jnp.float32
    num_layers = len(packed_ws)
    final_act = ("none" if is_wasserstein
                 else ("softmax" if out_dim > 1 else "sigmoid"))
    kernel = _make_discriminator_kernel(num_layers, non_linear, final_act, out_dim)

    # bf16 input: halves input DMA bytes / VMEM; numerics unchanged (x would be quantized to
    # bf16 before the first MXU matmul anyway).
    x_bf = x if x.dtype == jnp.bfloat16 else x.astype(jnp.bfloat16)

    # Batch grid: single step for small batches; at large B use big blocks (amortize the
    # ~0.35us/step overhead, fill MXU M-dim) but keep >= 2 steps so v7x's two TensorCores can
    # both get work under dimension_semantics=("parallel",).
    if B <= batch_block:
        bb = B
    else:
        half = _round_up(pl.cdiv(B, 2), _SUBLANE)
        bb = min(batch_block, half)
    grid = (pl.cdiv(B, bb),)

    x_spec = pl.BlockSpec((bb, d_in), lambda i: (i, 0))
    out_spec = pl.BlockSpec((bb, out_dim), lambda i: (i, 0))   # slim, lane-masked store
    param_specs = []
    flat_inputs = [x_bf]
    for w, b in zip(packed_ws, packed_bs):
        param_specs.append(pl.BlockSpec(w.shape, lambda i: (0, 0)))  # VMEM-resident
        param_specs.append(pl.BlockSpec(b.shape, lambda i: (0, 0)))
        flat_inputs += [w, b]

    # Advisory cost hint for XLA's scheduler (this call is tiny).
    param_bytes = (sum(w.size * w.dtype.itemsize for w in packed_ws)
                   + sum(b.size * b.dtype.itemsize for b in packed_bs))
    flops = 2 * B * sum(w.shape[0] * w.shape[1] for w in packed_ws)
    transcendentals = 0 if final_act == "none" else B * packed_ws[-1].shape[1]
    bytes_accessed = (x_bf.size * x_bf.dtype.itemsize + param_bytes
                      + B * out_dim * jnp.dtype(out_dtype).itemsize)
    cost = pl.CostEstimate(flops=flops, transcendentals=transcendentals,
                           bytes_accessed=bytes_accessed)

    # Every operand is double-buffered by default; only raise the scoped-VMEM limit when the
    # resident footprint would exceed the smallest (v5e) default, and stay under v7x's 64 MiB.
    block_bytes = bb * d_in * 2 + bb * out_dim * jnp.dtype(out_dtype).itemsize
    vmem_need = 2 * (param_bytes + block_bytes) + (2 << 20)
    vmem_limit = None if vmem_need <= (16 << 20) else min(vmem_need, 60 << 20)

    return pl.pallas_call(
        kernel,
        out_shape=jax.ShapeDtypeStruct((B, out_dim), out_dtype),
        grid=grid,
        in_specs=[x_spec] + param_specs,
        out_specs=out_spec,
        compiler_params=pltpu.CompilerParams(
            dimension_semantics=("parallel",),
            vmem_limit_bytes=vmem_limit),
        cost_estimate=cost,
    )(*flat_inputs)


# ----------------------------- references & init ------------------------------------------------

def _torch_linear_init(key, out_dim, in_dim):
    """Deterministic PyTorch-style Linear init: U(-1/sqrt(in), 1/sqrt(in))."""
    kw, kb = jax.random.split(key)
    bound = 1.0 / jnp.sqrt(jnp.float32(in_dim))
    w = jax.random.uniform(kw, (out_dim, in_dim), jnp.float32, -bound, bound)
    b = jax.random.uniform(kb, (out_dim,), jnp.float32, -bound, bound)
    return w, b


def _reference_forward_f32(x, torch_weights, torch_biases, *, non_linear, is_wasserstein):
    """Exact module semantics in f32 (eval-mode dropout)."""
    h = x
    n = len(torch_weights)
    for i, (w, b) in enumerate(zip(torch_weights, torch_biases)):
        h = h @ w.T + b
        if i < n - 1 and non_linear:
            h = jnp.maximum(h, 0.0)
    if is_wasserstein:
        return h
    if torch_weights[-1].shape[0] > 1:
        return jax.nn.softmax(h, axis=-1)
    return jax.nn.sigmoid(h)


def _reference_forward_packed(x, packed_ws, packed_bs, *, out_dim, non_linear, is_wasserstein):
    """Same math as the kernel, mirroring the bf16 MXU operand precision (f32 accumulate)."""
    h = x.astype(jnp.float32)
    n = len(packed_ws)
    for i, (w, b) in enumerate(zip(packed_ws, packed_bs)):
        h = jnp.dot(h.astype(w.dtype).astype(jnp.float32), w.astype(jnp.float32)) + b
        if i < n - 1 and non_linear:
            h = jnp.maximum(h, 0.0)
    logits = h[:, :out_dim]
    if is_wasserstein:
        return logits
    if out_dim > 1:
        return jax.nn.softmax(logits, axis=-1)
    return jax.nn.sigmoid(logits)


if __name__ == "__main__":
    input_dim = 32
    hidden_layer_dim = [64, 32]
    non_linear = True

    key = jax.random.PRNGKey(0)
    kx_s, kx_l, kp_a, kp_c = jax.random.split(key, 4)
    x_small = jax.random.normal(kx_s, (8, input_dim), jnp.float32)
    x_large = jax.random.normal(kx_l, (1536, input_dim), jnp.float32)  # multi-step grid path

    def build_params(output_dim, k):
        sizes = [input_dim] + hidden_layer_dim + [output_dim]
        keys = jax.random.split(k, len(sizes) - 1)
        ws, bs = [], []
        for kk, (d0, d1) in zip(keys, zip(sizes[:-1], sizes[1:])):
            w, b = _torch_linear_init(kk, d1, d0)
            ws.append(w)
            bs.append(b)
        return ws, bs

    checks = []

    def run_and_record(x, pw, pb, ws, bs, *, out_dim, is_wasserstein, batch_block=1024):
        fwd = jax.jit(functools.partial(discriminator_forward, out_dim=out_dim,
                                        non_linear=non_linear,
                                        is_wasserstein=is_wasserstein,
                                        batch_block=batch_block))
        out = fwd(x, pw, pb)
        checks.append((
            out,
            _reference_forward_packed(x, pw, pb, out_dim=out_dim,
                                      non_linear=non_linear, is_wasserstein=is_wasserstein),
            _reference_forward_f32(x, ws, bs,
                                   non_linear=non_linear, is_wasserstein=is_wasserstein),
        ))

    # Config A: output_dim=3 (>1) -> softmax head.
    ws_a, bs_a = build_params(3, kp_a)
    pw_a, pb_a = pack_discriminator_params(ws_a, bs_a)       # packed ONCE
    run_and_record(x_small, pw_a, pb_a, ws_a, bs_a, out_dim=3, is_wasserstein=False)

    # Config B: is_wasserstein=True -> raw logits (same params as A).
    run_and_record(x_small, pw_a, pb_a, ws_a, bs_a, out_dim=3, is_wasserstein=True)

    # Config C: output_dim=1 -> sigmoid head.
    ws_c, bs_c = build_params(1, kp_c)
    pw_c, pb_c = pack_discriminator_params(ws_c, bs_c)
    run_and_record(x_small, pw_c, pb_c, ws_c, bs_c, out_dim=1, is_wasserstein=False)

    # Config D: larger batch -> multi-step grid (batch_block=512 => 3 grid steps).
    run_and_record(x_large, pw_a, pb_a, ws_a, bs_a, out_dim=3, is_wasserstein=False,
                   batch_block=512)

    jax.block_until_ready([c[0] for c in checks])

    for out, ref_packed, ref_f32 in checks:
        assert out.shape == ref_f32.shape
        # Check against a reference mirroring the bf16 MXU operand precision
        # (margin covers the EUP approx-reciprocal in the softmax/sigmoid heads).
        assert jnp.allclose(out, ref_packed, atol=1e-2, rtol=1e-2)
        # Coarse check against exact f32 module semantics (difference = bf16 quantization).
        assert jnp.allclose(out, ref_f32, atol=5e-2, rtol=5e-2)

    print("KERNEL_OK")
</pallas_src>

<mosaic_0001>
module attributes {stable_mosaic.version = 11 : i64} {
  func.func @kernel(%arg0: i32, %arg1: memref<8x32xbf16, #tpu.memory_space<vmem>>, %arg2: memref<32x128xbf16, #tpu.memory_space<vmem>>, %arg3: memref<1x128xf32, #tpu.memory_space<vmem>>, %arg4: memref<128x128xbf16, #tpu.memory_space<vmem>>, %arg5: memref<1x128xf32, #tpu.memory_space<vmem>>, %arg6: memref<128x128xbf16, #tpu.memory_space<vmem>>, %arg7: memref<1x128xf32, #tpu.memory_space<vmem>>, %arg8: memref<8x3xf32, #tpu.memory_space<vmem>>) attributes {dimension_semantics = [#tpu.dimension_semantics<parallel>], iteration_bounds = array<i64: 1>, scalar_prefetch = 0 : i64, scratch_operands = 0 : i64, tpu.core_type = #tpu.core_type<tc>, window_params = [{transform_indices = @transform_0, window_bounds = array<i64: 8, 32>}, {pipeline_mode = #tpu.pipeline_mode<synchronous>, transform_indices = @transform_1, window_bounds = array<i64: 32, 128>}, {pipeline_mode = #tpu.pipeline_mode<synchronous>, transform_indices = @transform_2, window_bounds = array<i64: 1, 128>}, {pipeline_mode = #tpu.pipeline_mode<synchronous>, transform_indices = @transform_3, window_bounds = array<i64: 128, 128>}, {pipeline_mode = #tpu.pipeline_mode<synchronous>, transform_indices = @transform_4, window_bounds = array<i64: 1, 128>}, {pipeline_mode = #tpu.pipeline_mode<synchronous>, transform_indices = @transform_5, window_bounds = array<i64: 128, 128>}, {pipeline_mode = #tpu.pipeline_mode<synchronous>, transform_indices = @transform_6, window_bounds = array<i64: 1, 128>}, {transform_indices = @transform_7, window_bounds = array<i64: 8, 3>}]} {
    %c0 = arith.constant 0 : index
    %c0_0 = arith.constant 0 : index
    %0 = vector.load %arg1[%c0, %c0_0] : memref<8x32xbf16, #tpu.memory_space<vmem>>, vector<8x32xbf16>
    %c0_1 = arith.constant 0 : index
    %c0_2 = arith.constant 0 : index
    %1 = vector.load %arg2[%c0_1, %c0_2] : memref<32x128xbf16, #tpu.memory_space<vmem>>, vector<32x128xbf16>
    %cst = arith.constant dense<0.000000e+00> : vector<8x128xf32>
    %2 = tpu.matmul %0, %1, %cst {dimension_numbers = #tpu.dot_dimension_numbers<[1], [0], [0], [1], [0, 0, 1, 1], [], []>} : vector<8x32xbf16>, vector<32x128xbf16>, vector<8x128xf32> -> vector<8x128xf32>
    %c0_3 = arith.constant 0 : index
    %c0_4 = arith.constant 0 : index
    %3 = vector.load %arg3[%c0_3, %c0_4] : memref<1x128xf32, #tpu.memory_space<vmem>>, vector<1x128xf32>
    %4 = vector.broadcast %3 : vector<1x128xf32> to vector<8x128xf32>
    %5 = arith.addf %2, %4 : vector<8x128xf32>
    %cst_5 = arith.constant 0.000000e+00 : f32
    %6 = vector.broadcast %cst_5 : f32 to vector<8x128xf32>
    %7 = arith.maximumf %5, %6 : vector<8x128xf32>
    %8 = arith.truncf %7 : vector<8x128xf32> to vector<8x128xbf16>
    %c0_6 = arith.constant 0 : index
    %c0_7 = arith.constant 0 : index
    %9 = vector.load %arg4[%c0_6, %c0_7] : memref<128x128xbf16, #tpu.memory_space<vmem>>, vector<128x128xbf16>
    %cst_8 = arith.constant dense<0.000000e+00> : vector<8x128xf32>
    %10 = tpu.matmul %8, %9, %cst_8 {dimension_numbers = #tpu.dot_dimension_numbers<[1], [0], [0], [1], [0, 0, 1, 1], [], []>} : vector<8x128xbf16>, vector<128x128xbf16>, vector<8x128xf32> -> vector<8x128xf32>
    %c0_9 = arith.constant 0 : index
    %c0_10 = arith.constant 0 : index
    %11 = vector.load %arg5[%c0_9, %c0_10] : memref<1x128xf32, #tpu.memory_space<vmem>>, vector<1x128xf32>
    %12 = vector.broadcast %11 : vector<1x128xf32> to vector<8x128xf32>
    %13 = arith.addf %10, %12 : vector<8x128xf32>
    %cst_11 = arith.constant 0.000000e+00 : f32
    %14 = vector.broadcast %cst_11 : f32 to vector<8x128xf32>
    %15 = arith.maximumf %13, %14 : vector<8x128xf32>
    %16 = arith.truncf %15 : vector<8x128xf32> to vector<8x128xbf16>
    %c0_12 = arith.constant 0 : index
    %c0_13 = arith.constant 0 : index
    %17 = vector.load %arg6[%c0_12, %c0_13] : memref<128x128xbf16, #tpu.memory_space<vmem>>, vector<128x128xbf16>
    %cst_14 = arith.constant dense<0.000000e+00> : vector<8x128xf32>
    %18 = tpu.matmul %16, %17, %cst_14 {dimension_numbers = #tpu.dot_dimension_numbers<[1], [0], [0], [1], [0, 0, 1, 1], [], []>} : vector<8x128xbf16>, vector<128x128xbf16>, vector<8x128xf32> -> vector<8x128xf32>
    %c0_15 = arith.constant 0 : index
    %c0_16 = arith.constant 0 : index
    %19 = vector.load %arg7[%c0_15, %c0_16] : memref<1x128xf32, #tpu.memory_space<vmem>>, vector<1x128xf32>
    %20 = vector.broadcast %19 : vector<1x128xf32> to vector<8x128xf32>
    %21 = arith.addf %18, %20 : vector<8x128xf32>
    %22 = tpu.iota {dimensions = array<i32: 1>} : vector<8x128xi32>
    %c3_i32 = arith.constant 3 : i32
    %23 = vector.broadcast %c3_i32 : i32 to vector<8x128xi32>
    %24 = arith.cmpi slt, %22, %23 : vector<8x128xi32>
    %cst_17 = arith.constant 0xFF800000 : f32
    %25 = vector.broadcast %cst_17 : f32 to vector<8x128xf32>
    %26 = arith.select %24, %21, %25 : vector<8x128xi1>, vector<8x128xf32>
    %cst_18 = arith.constant dense<0xFF800000> : vector<8xf32>
    %27 = vector.multi_reduction <maximumf>, %26, %cst_18 [1] : vector<8x128xf32> to vector<8xf32>
    %28 = vector.shape_cast %27 : vector<8xf32> to vector<8x1xf32>
    %29 = vector.broadcast %28 : vector<8x1xf32> to vector<8x128xf32>
    %30 = arith.subf %26, %29 : vector<8x128xf32>
    %31 = math.exp %30 : vector<8x128xf32>
    %cst_19 = arith.constant dense<0.000000e+00> : vector<8xf32>
    %32 = vector.multi_reduction <add>, %31, %cst_19 [1] : vector<8x128xf32> to vector<8xf32>
    %33 = vector.shape_cast %32 : vector<8xf32> to vector<8x1xf32>
    %34 = tpu.reciprocal %33 {approx = true} : vector<8x1xf32> -> vector<8x1xf32>
    %35 = vector.broadcast %34 : vector<8x1xf32> to vector<8x128xf32>
    %36 = arith.mulf %31, %35 : vector<8x128xf32>
    %37 = vector.extract_strided_slice %36 {offsets = [0, 0], sizes = [8, 3], strides = [1, 1]} : vector<8x128xf32> to vector<8x3xf32>
    %c0_20 = arith.constant 0 : index
    %c0_21 = arith.constant 0 : index
    %38 = vector.load %arg8[%c0_20, %c0_21] : memref<8x3xf32, #tpu.memory_space<vmem>>, vector<8x3xf32>
    tpu.vector_store %arg8[%c0_20, %c0_21], %37 {strides = array<i32>} : memref<8x3xf32, #tpu.memory_space<vmem>>, vector<8x3xf32>,
    return
  }
  func.func @transform_0(%arg0: i32) -> (i32, i32) {
    %c0_i32 = arith.constant 0 : i32
    %c0_i32_0 = arith.constant 0 : i32
    return %arg0, %c0_i32 : i32, i32
  }
  func.func @transform_1(%arg0: i32) -> (i32, i32) {
    %c0_i32 = arith.constant 0 : i32
    %c0_i32_0 = arith.constant 0 : i32
    %c0_i32_1 = arith.constant 0 : i32
    return %c0_i32, %c0_i32_0 : i32, i32
  }
  func.func @transform_2(%arg0: i32) -> (i32, i32) {
    %c0_i32 = arith.constant 0 : i32
    %c0_i32_0 = arith.constant 0 : i32
    %c0_i32_1 = arith.constant 0 : i32
    return %c0_i32, %c0_i32_0 : i32, i32
  }
  func.func @transform_3(%arg0: i32) -> (i32, i32) {
    %c0_i32 = arith.constant 0 : i32
    %c0_i32_0 = arith.constant 0 : i32
    %c0_i32_1 = arith.constant 0 : i32
    return %c0_i32, %c0_i32_0 : i32, i32
  }
  func.func @transform_4(%arg0: i32) -> (i32, i32) {
    %c0_i32 = arith.constant 0 : i32
    %c0_i32_0 = arith.constant 0 : i32
    %c0_i32_1 = arith.constant 0 : i32
    return %c0_i32, %c0_i32_0 : i32, i32
  }
  func.func @transform_5(%arg0: i32) -> (i32, i32) {
    %c0_i32 = arith.constant 0 : i32
    %c0_i32_0 = arith.constant 0 : i32
    %c0_i32_1 = arith.constant 0 : i32
    return %c0_i32, %c0_i32_0 : i32, i32
  }
  func.func @transform_6(%arg0: i32) -> (i32, i32) {
    %c0_i32 = arith.constant 0 : i32
    %c0_i32_0 = arith.constant 0 : i32
    %c0_i32_1 = arith.constant 0 : i32
    return %c0_i32, %c0_i32_0 : i32, i32
  }
  func.func @transform_7(%arg0: i32) -> (i32, i32) {
    %c0_i32 = arith.constant 0 : i32
    %c0_i32_0 = arith.constant 0 : i32
    return %arg0, %c0_i32 : i32, i32
  }
}

</mosaic_0001>

<llo_original>
// kernel: discriminator_forward.1
$region0: #{discriminator_forward.1}
  #allocation0 [shape = 'u32[]', space=smem, size = 0x4, offset = 0x4, fixed_abs, tag = 'smem constant byte address 0x4 - core index']
  #allocation1 [shape = 'u32[144,128]{1,0:T(1,128)}', space=vmem, size = 0x12000, scoped, tag = 'internal scratch']
  %s0 = inlined_call_operand.vmem [shape: bf16[8,32], index: 0, kind: input, shape index: {}]
  %s1 = inlined_call_operand.hbm [shape: bf16[32,128], index: 1, kind: input, shape index: {}]
  %s2 = inlined_call_operand.vmem [shape: f32[1,128], index: 2, kind: input, shape index: {}]
  %s3 = inlined_call_operand.hbm [shape: bf16[128,128], index: 3, kind: input, shape index: {}]
  %s4 = inlined_call_operand.vmem [shape: f32[1,128], index: 4, kind: input, shape index: {}]
  %s5 = inlined_call_operand.hbm [shape: bf16[128,128], index: 5, kind: input, shape index: {}]
  %s6 = inlined_call_operand.vmem [shape: f32[1,128], index: 6, kind: input, shape index: {}]
  %s7 = inlined_call_operand.vmem [shape: f32[8,3], index: 7, kind: output, shape index: {}]
  %s8 = sld [smem:[#allocation0]]
  $region50: #{discriminator_forward.1} parent=0
    _
  %s10 = ssub.s32 1, %s8
  %s11 = scalar_select 0, %s10, %s8
  $region1: #{discriminator_forward.1} parent=0
    #allocation2 [shape = 'u8[8192]{0}', space=vmem, size = 0x2000, scoped, tag = 'input window, operand 1, single buffered']
    #allocation3 [shape = 's32[1]{0}', space=sflag, size = 0x4, scoped, tag = 'scoped memory for discriminator_forward.1']
    #allocation4 [shape = 'u8[32768]{0}', space=vmem, size = 0x8000, scoped, tag = 'input window, operand 3, single buffered']
    #allocation5 [shape = 's32[1]{0}', space=sflag, size = 0x4, scoped, tag = 'scoped memory for discriminator_forward.1']
    #allocation6 [shape = 'u8[32768]{0}', space=vmem, size = 0x8000, scoped, tag = 'input window, operand 5, single buffered']
    %12 = vsyncpa [#allocation3], 0
    %13 = vsyncpa [#allocation5], 0
    // Predicated region
    $region2: #{discriminator_forward.1} parent=1 // pred_check
      _
    $region3: #{discriminator_forward.1} parent=1 // pred_check_branch
      %15 = sbr.rel (0) target = $region5
    $region4: #{discriminator_forward.1} parent=1 // pred_region
      _
    $region5: #{discriminator_forward.1} parent=1 // pred_fallthru
      _
    // Predicated region
    $region6: #{discriminator_forward.1} parent=1 // pred_check
      _
    $region7: #{discriminator_forward.1} parent=1 // pred_check_branch
      %17 = sbr.rel (0) target = $region9
    $region8: #{discriminator_forward.1} parent=1 // pred_region
      %s19 = ssub.s32 256, 256
      %20 = vsyncadd [#allocation3], %s19
      %s21 = sshll.u32 [#allocation2], 4
      %s22 = int_to_ptr.vmem [resolvable:$true] %s21
      %27 = dma.hbm_to_vmem [thread:$0]  %s1, 256, %s22, [#allocation3], 64, 64, 4
    $region9: #{discriminator_forward.1} parent=1 // pred_fallthru
      _
    // Predicated region
    $region10: #{discriminator_forward.1} parent=1 // pred_check
      _
    $region11: #{discriminator_forward.1} parent=1 // pred_check_branch
      %29 = sbr.rel (0) target = $region13
    $region12: #{discriminator_forward.1} parent=1 // pred_region
      _
    $region13: #{discriminator_forward.1} parent=1 // pred_fallthru
      _
    // Predicated region
    $region14: #{discriminator_forward.1} parent=1 // pred_check
      _
    $region15: #{discriminator_forward.1} parent=1 // pred_check_branch
      %31 = sbr.rel (0) target = $region17
    $region16: #{discriminator_forward.1} parent=1 // pred_region
      %s33 = ssub.s32 1024, 1024
      %34 = vsyncadd [#allocation5], %s33
      %s35 = sshll.u32 [#allocation4], 4
      %s36 = int_to_ptr.vmem [resolvable:$true] %s35
      %41 = dma.hbm_to_vmem [thread:$0]  %s3, 1024, %s36, [#allocation5], 64, 64, 4
    $region17: #{discriminator_forward.1} parent=1 // pred_fallthru
      _
    // Predicated region
    $region18: #{discriminator_forward.1} parent=1 // pred_check
      _
    $region19: #{discriminator_forward.1} parent=1 // pred_check_branch
      %43 = sbr.rel (0) target = $region21
    $region20: #{discriminator_forward.1} parent=1 // pred_region
      _
    $region21: #{discriminator_forward.1} parent=1 // pred_fallthru
      _
    // Predicated region
    $region22: #{discriminator_forward.1} parent=1 // pred_check
      _
    $region23: #{discriminator_forward.1} parent=1 // pred_check_branch
      %45 = sbr.rel (0) target = $region25
    $region24: #{discriminator_forward.1} parent=1 // pred_region
      %s47 = ssub.s32 1024, 1024
      %48 = vsyncadd [#allocation5], %s47
      %s49 = sshll.u32 [#allocation6], 4
      %s50 = int_to_ptr.vmem [resolvable:$true] %s49
      %55 = dma.hbm_to_vmem [thread:$0]  %s5, 1024, %s50, [#allocation5], 64, 64, 4
    $region25: #{discriminator_forward.1} parent=1 // pred_fallthru
      _
    // Predicated region
    $region26: #{discriminator_forward.1} parent=1 // pred_check
      _
    $region27: #{discriminator_forward.1} parent=1 // pred_check_branch
      %57 = sbr.rel (0) target = $region29
    $region28: #{discriminator_forward.1} parent=1 // pred_region
      _
    $region29: #{discriminator_forward.1} parent=1 // pred_fallthru
      _
    // Predicated region
    $region30: #{discriminator_forward.1} parent=1 // pred_check
      _
    $region31: #{discriminator_forward.1} parent=1 // pred_check_branch
      %59 = sbr.rel (0) target = $region33
    $region32: #{discriminator_forward.1} parent=1 // pred_region
      %60 = dma.done [#allocation3], 256
    $region33: #{discriminator_forward.1} parent=1 // pred_fallthru
      _
    // Predicated region
    $region34: #{discriminator_forward.1} parent=1 // pred_check
      _
    $region35: #{discriminator_forward.1} parent=1 // pred_check_branch
      %62 = sbr.rel (0) target = $region37
    $region36: #{discriminator_forward.1} parent=1 // pred_region
      %63 = dma.done [#allocation5], 1024
    $region37: #{discriminator_forward.1} parent=1 // pred_fallthru
      _
    // Predicated region
    $region38: #{discriminator_forward.1} parent=1 // pred_check
      _
    $region39: #{discriminator_forward.1} parent=1 // pred_check_branch
      %65 = sbr.rel (0) target = $region41
    $region40: #{discriminator_forward.1} parent=1 // pred_region
      %66 = dma.done [#allocation5], 1024
    $region41: #{discriminator_forward.1} parent=1 // pred_fallthru
      _
    %v68 = vld [vmem:[%s0] sm:$0xf]
    %v69 = vld [vmem:[#allocation2] sm:$0xf]
    %v70 = vld [vmem:[#allocation2 + $0x4] sm:$0xf]
    %v71 = vld [vmem:[#allocation2 + $0x8] sm:$0xf]
    %v72 = vld [vmem:[#allocation2 + $0xc] sm:$0xf]
    %v73 = vld [vmem:[%s2] sm:$0x1]
    %v75 = vlaneseq
    %v76 = vshrl.u32 %v75, 7
    %v77 = vsub.s32 0, %v76
    %v78 = vrot.slane %v73, %v77
    %v84 = vunpack.c.l.b16 %v69
    %v85 = vunpack.c.l.b16 %v70
    %v86 = vunpack.c.l.b16 %v71
    %v87 = vunpack.c.l.b16 %v72
    %v88 = vpack.c.b16 %v85, %v84
    %v89 = vpack.c.b16 %v87, %v86
    %vm92 = vcmask 261120
    %v94 = vsel %vm92, %v68, 0
    %96 = vmatprep.subr.bf16.mxu0 0
    %97 = vmatpush1.bf16.msra.mxu0 %v88
    %98 = vmatprep.subr.bf16.mxu0 0
    %99 = vmatpush1.bf16.msra.mxu0 %v89
    %100 = vmatprep.subr.bf16.mxu0 0
    %101 = vmatpush1.bf16.msra.mxu0 0
    %102 = vmatprep.subr.bf16.mxu0 0
    %103 = vmatpush1.bf16.msra.mxu0 0
    %104 = vmatprep.subr.bf16.mxu0 0
    %105 = vmatpush1.bf16.msra.mxu0 0
    %106 = vmatprep.subr.bf16.mxu0 0
    %107 = vmatpush1.bf16.msra.mxu0 0
    %108 = vmatprep.subr.bf16.mxu0 0
    %109 = vmatpush1.bf16.msra.mxu0 0
    %110 = vmatprep.subr.bf16.mxu0 0
    %111 = vmatpush1.bf16.msra.mxu0 0
    %112 = vmatprep.subr.bf16.mxu0 0
    %113 = vmatpush1.bf16.msra.mxu0 0
    %114 = vmatprep.subr.bf16.mxu0 0
    %115 = vmatpush1.bf16.msra.mxu0 0
    %116 = vmatprep.subr.bf16.mxu0 0
    %117 = vmatpush1.bf16.msra.mxu0 0
    %118 = vmatprep.subr.bf16.mxu0 0
    %119 = vmatpush1.bf16.msra.mxu0 0
    %120 = vmatprep.subr.bf16.mxu0 0
    %121 = vmatpush1.bf16.msra.mxu0 0
    %122 = vmatprep.subr.bf16.mxu0 0
    %123 = vmatpush1.bf16.msra.mxu0 0
    %124 = vmatprep.subr.bf16.mxu0 0
    %125 = vmatpush1.bf16.msra.mxu0 0
    %126 = vmatprep.subr.bf16.mxu0 0
    %127 = vmatpush1.bf16.msra.mxu0 0
    %128 = vmatprep.mubr.bf16.mxu0 0
    %129 = vmatmul.mubr.bf16.gmra.mrb[0].mxu0 %v94
    %v130 = vpop.f32.mrb[0].mxu0
    %v131 = vadd.f32 %v78, %v130
    %v132 = vpop.f32.mrb[0].mxu0
    %v133 = vpop.f32.mrb[0].mxu0
    %v134 = vpop.f32.mrb[0].mxu0
    %135 = vdwg.mxu0
    %v136 = vmax.f32 %v131, 0.0
    %v137 = vpack.c.bf16 %v136, %v136
    %v138 = vld [vmem:[#allocation4] sm:$0xf]
    %v139 = vld [vmem:[#allocation4 + $0x4] sm:$0xf]
    %v140 = vld [vmem:[#allocation4 + $0x8] sm:$0xf]
    %v141 = vld [vmem:[#allocation4 + $0xc] sm:$0xf]
    %v142 = vld [vmem:[#allocation4 + $0x10] sm:$0xf]
    %v143 = vld [vmem:[#allocation4 + $0x14] sm:$0xf]
    %v144 = vld [vmem:[#allocation4 + $0x18] sm:$0xf]
    %v145 = vld [vmem:[#allocation4 + $0x1c] sm:$0xf]
    %v146 = vld [vmem:[#allocation4 + $0x20] sm:$0xf]
    %v147 = vld [vmem:[#allocation4 + $0x24] sm:$0xf]
    %v148 = vld [vmem:[#allocation4 + $0x28] sm:$0xf]
    %v149 = vld [vmem:[#allocation4 + $0x2c] sm:$0xf]
    %v150 = vld [vmem:[#allocation4 + $0x30] sm:$0xf]
    %v151 = vld [vmem:[#allocation4 + $0x34] sm:$0xf]
    %v152 = vld [vmem:[#allocation4 + $0x38] sm:$0xf]
    %v153 = vld [vmem:[#allocation4 + $0x3c] sm:$0xf]
    %v154 = vld [vmem:[%s4] sm:$0x1]
    %v156 = vlaneseq
    %v157 = vshrl.u32 %v156, 7
    %v158 = vsub.s32 0, %v157
    %v159 = vrot.slane %v154, %v158
    %v177 = vunpack.c.l.b16 %v138
    %v178 = vunpack.c.l.b16 %v139
    %v179 = vunpack.c.l.b16 %v140
    %v180 = vunpack.c.l.b16 %v141
    %v181 = vunpack.c.l.b16 %v142
    %v182 = vunpack.c.l.b16 %v143
    %v183 = vunpack.c.l.b16 %v144
    %v184 = vunpack.c.l.b16 %v145
    %v185 = vunpack.c.l.b16 %v146
    %v186 = vunpack.c.l.b16 %v147
    %v187 = vunpack.c.l.b16 %v148
    %v188 = vunpack.c.l.b16 %v149
    %v189 = vunpack.c.l.b16 %v150
    %v190 = vunpack.c.l.b16 %v151
    %v191 = vunpack.c.l.b16 %v152
    %v192 = vunpack.c.l.b16 %v153
    %v193 = vpack.c.b16 %v178, %v177
    %v194 = vpack.c.b16 %v180, %v179
    %v195 = vpack.c.b16 %v182, %v181
    %v196 = vpack.c.b16 %v184, %v183
    %v197 = vpack.c.b16 %v186, %v185
    %v198 = vpack.c.b16 %v188, %v187
    %v199 = vpack.c.b16 %v190, %v189
    %v200 = vpack.c.b16 %v192, %v191
    %209 = vmatprep.subr.bf16.mxu0 0
    %210 = vmatpush1.bf16.msra.mxu0 %v193
    %211 = vmatprep.subr.bf16.mxu0 0
    %212 = vmatpush1.bf16.msra.mxu0 %v194
    %213 = vmatprep.subr.bf16.mxu0 0
    %214 = vmatpush1.bf16.msra.mxu0 %v195
    %215 = vmatprep.subr.bf16.mxu0 0
    %216 = vmatpush1.bf16.msra.mxu0 %v196
    %217 = vmatprep.subr.bf16.mxu0 0
    %218 = vmatpush1.bf16.msra.mxu0 %v197
    %219 = vmatprep.subr.bf16.mxu0 0
    %220 = vmatpush1.bf16.msra.mxu0 %v198
    %221 = vmatprep.subr.bf16.mxu0 0
    %222 = vmatpush1.bf16.msra.mxu0 %v199
    %223 = vmatprep.subr.bf16.mxu0 0
    %224 = vmatpush1.bf16.msra.mxu0 %v200
    %225 = vmatprep.subr.bf16.mxu0 0
    %226 = vmatpush1.bf16.msra.mxu0 0
    %227 = vmatprep.subr.bf16.mxu0 0
    %228 = vmatpush1.bf16.msra.mxu0 0
    %229 = vmatprep.subr.bf16.mxu0 0
    %230 = vmatpush1.bf16.msra.mxu0 0
    %231 = vmatprep.subr.bf16.mxu0 0
    %232 = vmatpush1.bf16.msra.mxu0 0
    %233 = vmatprep.subr.bf16.mxu0 0
    %234 = vmatpush1.bf16.msra.mxu0 0
    %235 = vmatprep.subr.bf16.mxu0 0
    %236 = vmatpush1.bf16.msra.mxu0 0
    %237 = vmatprep.subr.bf16.mxu0 0
    %238 = vmatpush1.bf16.msra.mxu0 0
    %239 = vmatprep.subr.bf16.mxu0 0
    %240 = vmatpush1.bf16.msra.mxu0 0
    %241 = vmatprep.mubr.bf16.mxu0 0
    %242 = vmatmul.mubr.bf16.gmra.mrb[0].mxu0 %v137
    %v243 = vpop.f32.mrb[0].mxu0
    %v244 = vadd.f32 %v159, %v243
    %v245 = vpop.f32.mrb[0].mxu0
    %v246 = vpop.f32.mrb[0].mxu0
    %v247 = vpop.f32.mrb[0].mxu0
    %248 = vdwg.mxu0
    %v249 = vmax.f32 %v244, 0.0
    %v250 = vpack.c.bf16 %v249, %v249
    %v251 = vld [vmem:[#allocation6] sm:$0xf]
    %v252 = vld [vmem:[#allocation6 + $0x4] sm:$0xf]
    %v253 = vld [vmem:[#allocation6 + $0x8] sm:$0xf]
    %v254 = vld [vmem:[#allocation6 + $0xc] sm:$0xf]
    %v255 = vld [vmem:[#allocation6 + $0x10] sm:$0xf]
    %v256 = vld [vmem:[#allocation6 + $0x14] sm:$0xf]
    %v257 = vld [vmem:[#allocation6 + $0x18] sm:$0xf]
    %v258 = vld [vmem:[#allocation6 + $0x1c] sm:$0xf]
    %v259 = vld [vmem:[#allocation6 + $0x20] sm:$0xf]
    %v260 = vld [vmem:[#allocation6 + $0x24] sm:$0xf]
    %v261 = vld [vmem:[#allocation6 + $0x28] sm:$0xf]
    %v262 = vld [vmem:[#allocation6 + $0x2c] sm:$0xf]
    %v263 = vld [vmem:[#allocation6 + $0x30] sm:$0xf]
    %v264 = vld [vmem:[#allocation6 + $0x34] sm:$0xf]
    %v265 = vld [vmem:[#allocation6 + $0x38] sm:$0xf]
    %v266 = vld [vmem:[#allocation6 + $0x3c] sm:$0xf]
    %v267 = vld [vmem:[%s6] sm:$0x1]
    %v269 = vlaneseq
    %v270 = vshrl.u32 %v269, 7
    %v271 = vsub.s32 0, %v270
    %v272 = vrot.slane %v267, %v271
    %v290 = vunpack.c.l.b16 %v251
    %v291 = vunpack.c.l.b16 %v252
    %v292 = vunpack.c.l.b16 %v253
    %v293 = vunpack.c.l.b16 %v254
    %v294 = vunpack.c.l.b16 %v255
    %v295 = vunpack.c.l.b16 %v256
    %v296 = vunpack.c.l.b16 %v257
    %v297 = vunpack.c.l.b16 %v258
    %v298 = vunpack.c.l.b16 %v259
    %v299 = vunpack.c.l.b16 %v260
    %v300 = vunpack.c.l.b16 %v261
    %v301 = vunpack.c.l.b16 %v262
    %v302 = vunpack.c.l.b16 %v263
    %v303 = vunpack.c.l.b16 %v264
    %v304 = vunpack.c.l.b16 %v265
    %v305 = vunpack.c.l.b16 %v266
    %v306 = vpack.c.b16 %v291, %v290
    %v307 = vpack.c.b16 %v293, %v292
    %v308 = vpack.c.b16 %v295, %v294
    %v309 = vpack.c.b16 %v297, %v296
    %v310 = vpack.c.b16 %v299, %v298
    %v311 = vpack.c.b16 %v301, %v300
    %v312 = vpack.c.b16 %v303, %v302
    %v313 = vpack.c.b16 %v305, %v304
    %322 = vmatprep.subr.bf16.mxu0 0
    %323 = vmatpush1.bf16.msra.mxu0 %v306
    %324 = vmatprep.subr.bf16.mxu0 0
    %325 = vmatpush1.bf16.msra.mxu0 %v307
    %326 = vmatprep.subr.bf16.mxu0 0
    %327 = vmatpush1.bf16.msra.mxu0 %v308
    %328 = vmatprep.subr.bf16.mxu0 0
    %329 = vmatpush1.bf16.msra.mxu0 %v309
    %330 = vmatprep.subr.bf16.mxu0 0
    %331 = vmatpush1.bf16.msra.mxu0 %v310
    %332 = vmatprep.subr.bf16.mxu0 0
    %333 = vmatpush1.bf16.msra.mxu0 %v311
    %334 = vmatprep.subr.bf16.mxu0 0
    %335 = vmatpush1.bf16.msra.mxu0 %v312
    %336 = vmatprep.subr.bf16.mxu0 0
    %337 = vmatpush1.bf16.msra.mxu0 %v313
    %338 = vmatprep.subr.bf16.mxu0 0
    %339 = vmatpush1.bf16.msra.mxu0 0
    %340 = vmatprep.subr.bf16.mxu0 0
    %341 = vmatpush1.bf16.msra.mxu0 0
    %342 = vmatprep.subr.bf16.mxu0 0
    %343 = vmatpush1.bf16.msra.mxu0 0
    %344 = vmatprep.subr.bf16.mxu0 0
    %345 = vmatpush1.bf16.msra.mxu0 0
    %346 = vmatprep.subr.bf16.mxu0 0
    %347 = vmatpush1.bf16.msra.mxu0 0
    %348 = vmatprep.subr.bf16.mxu0 0
    %349 = vmatpush1.bf16.msra.mxu0 0
    %350 = vmatprep.subr.bf16.mxu0 0
    %351 = vmatpush1.bf16.msra.mxu0 0
    %352 = vmatprep.subr.bf16.mxu0 0
    %353 = vmatpush1.bf16.msra.mxu0 0
    %354 = vmatprep.mubr.bf16.mxu0 0
    %355 = vmatmul.mubr.bf16.gmra.mrb[0].mxu0 %v250
    %v356 = vpop.f32.mrb[0].mxu0
    %v357 = vadd.f32 %v272, %v356
    %v358 = vpop.f32.mrb[0].mxu0
    %v359 = vpop.f32.mrb[0].mxu0
    %v360 = vpop.f32.mrb[0].mxu0
    %361 = vdwg.mxu0
    %v362 = vlaneseq
    %v363 = vand.u32 %v362, 127
    %vm364 = vcmp.lt.s32.totalorder %v363, 3
    %v365 = vsel %vm364, %v357, -inf
    %366 = vmax.xlane.f32.xlu0 %v365
    %v367 = vpop.xlane.xlu0 %366
    %v368 = vsub.f32 %v365, %v367
    %v369 = vmul.f32 %v368, 1.442695
    %v370 = vpow.pop %v369
    %371 = vadd.xlane.f32.xlu0 %v370
    %v372 = vpop.xlane.xlu0 %371
    %v373 = vrcp.pop %v372
    %v374 = vmul.f32 %v370, %v373
    %vm375 = vcmask 23552
    %376 = vst.msk [vmem:[%s7] sm:$0xff] %vm375, %v374
    // Predicated region
    $region42: #{discriminator_forward.1} parent=1 // pred_check
      _
    $region43: #{discriminator_forward.1} parent=1 // pred_check_branch
      %378 = sbr.rel (0) target = $region45
    $region44: #{discriminator_forward.1} parent=1 // pred_region
      _
    $region45: #{discriminator_forward.1} parent=1 // pred_fallthru
      _
    // Predicated region
    $region46: #{discriminator_forward.1} parent=1 // pred_check
      _
    $region47: #{discriminator_forward.1} parent=1 // pred_check_branch
      %380 = sbr.rel (0) target = $region49
    $region48: #{discriminator_forward.1} parent=1 // pred_region
      _
    $region49: #{discriminator_forward.1} parent=1 // pred_fallthru
      _
    %381 = vsyncpa [#allocation3], 1
    %382 = vsyncpa [#allocation5], 1

</llo_original>
